<compile_context>
chip_gen: v5e
topology: v5e:2x2
jax: 0.10.0
libtpu: 0.0.40
codegen_flags: <defaults>
</compile_context>

<pallas_src>
import math

import jax
import jax.numpy as jnp
from jax.experimental import pallas as pl
from jax.experimental.pallas import tpu as pltpu


_TARGET_TILE_BYTES = 2 << 20    # ~2 MiB x tiles: measured HBM-roofline plateau
_TILE_VMEM_BUDGET = 40 << 20    # tile-selection budget; safe under v7x's 64 MiB
_VMEM_LIMIT_CAP = 64 << 20      # never request more scoped VMEM than v7x has


def _round_up(x, m):
    return ((x + m - 1) // m) * m


# ---------------------------------------------------------------------------
# Pallas kernel
# ---------------------------------------------------------------------------
def _dense_kernel(x_ref, w_ref, o_ref):
    """One (tn, Din) token tile: y = x @ w with f32 accumulation on the MXU."""
    x = x_ref[...]                        # (tn, Din)
    w = w_ref[...]                        # (Din, Dout), VMEM-resident, single copy
    if x.dtype != w.dtype:                # per-tile VPU cast, no extra HBM traffic
        x = x.astype(w.dtype)
    y = jnp.dot(x, w, preferred_element_type=jnp.float32)
    o_ref[...] = y.astype(o_ref.dtype)    # lane-dense store in the storage dtype


def _pick_token_tile(m, din, dout, x_item, o_item, w_bytes, *,
                     target_bytes=_TARGET_TILE_BYTES,
                     budget=_TILE_VMEM_BUDGET,
                     min_steps=2):
    """Byte-targeted token tile, clamped to VMEM budget and >= min_steps grid steps."""
    # bytes-targeted x tile
    tn = max(8, ((target_bytes // (din * x_item)) // 8) * 8)
    # fit 2*x_tile + 2*out_tile + W within a cross-generation VMEM budget
    per_row = 2 * (din * x_item + dout * o_item)
    avail = budget - w_bytes
    if avail >= per_row * 8:
        tn = min(tn, max(8, ((avail // per_row) // 8) * 8))
    else:
        tn = 8  # weight dominates VMEM; see TODO(synk) for the K/Dout-tiled variant
    # guarantee >= min_steps balanced grid steps so both v7x TensorCores get work
    if m >= 8 * min_steps:
        tn = min(tn, max(8, ((m // min_steps) // 8) * 8))
    # never exceed the (sublane-padded) problem size
    tn = min(tn, _round_up(m, 8))
    return int(tn)


def multi_head_dense(x, w_t, *, out_dtype=None):
    """x: (B, N, d_in), w_t: (d_in, d_out) prepared weight -> (B, N, d_out).

    out_dtype defaults to x.dtype, so a bf16 producer gets bf16 stores; pass
    out_dtype explicitly to override (e.g. f32 activations with a bf16 weight).
    """
    B, N, Din = x.shape
    Din_w, Dout = w_t.shape
    assert Din == Din_w, (Din, Din_w)
    if out_dtype is None:
        out_dtype = x.dtype

    x_item = jnp.dtype(x.dtype).itemsize
    w_item = jnp.dtype(w_t.dtype).itemsize
    o_item = jnp.dtype(out_dtype).itemsize
    w_bytes = Din * Dout * w_item

    # Flatten tokens; pad up to a tile multiple (padded rows are sliced off).
    M = B * N
    tn = _pick_token_tile(M, Din, Dout, x_item, o_item, w_bytes)
    Mp = _round_up(M, tn)
    xf = x.reshape(M, Din)
    if Mp != M:
        xf = jnp.pad(xf, ((0, Mp - M), (0, 0)))

    # Explicit scoped-VMEM sizing: 2x x-tile + 2x out-tile + 1x weight + headroom.
    vmem_needed = 2 * tn * Din * x_item + 2 * tn * Dout * o_item + w_bytes
    vmem_limit = int(min(_VMEM_LIMIT_CAP, max(16 << 20, vmem_needed + (4 << 20))))

    cost = pl.CostEstimate(
        flops=2 * M * Din * Dout,
        transcendentals=0,
        bytes_accessed=M * Din * x_item + w_bytes + M * Dout * o_item,
    )

    yf = pl.pallas_call(
        _dense_kernel,
        out_shape=jax.ShapeDtypeStruct((Mp, Dout), out_dtype),
        grid_spec=pltpu.PrefetchScalarGridSpec(
            num_scalar_prefetch=0,
            grid=(Mp // tn,),
            in_specs=[
                pl.BlockSpec((tn, Din), lambda i: (i, 0)),
                # whole weight, single-buffered, resident for the entire call
                pl.BlockSpec(memory_space=pltpu.MemorySpace.VMEM),
            ],
            out_specs=pl.BlockSpec((tn, Dout), lambda i: (i, 0)),
        ),
        compiler_params=pltpu.CompilerParams(
            dimension_semantics=("parallel",),
            vmem_limit_bytes=vmem_limit,
        ),
        cost_estimate=cost,
    )(xf, w_t)

    if Mp != M:
        yf = yf[:M]
    return yf.reshape(B, N, Dout)


# ---------------------------------------------------------------------------
# One-time parameter preparation (hoisted out of the forward)
# ---------------------------------------------------------------------------
def prepare_weight(w_torch_layout, *, dtype=None):
    """torch nn.Linear weight (d_out, d_in) -> matmul layout (d_in, d_out).

    Transpose and (optionally) downcast once here (e.g. dtype=jnp.bfloat16),
    so the forward pass never pays a wrapper-side astype / transpose per call.
    """
    w_t = jnp.transpose(w_torch_layout, (1, 0))
    if dtype is not None:
        w_t = w_t.astype(dtype)
    return w_t


# ---------------------------------------------------------------------------
if __name__ == "__main__":
    # MultiHeadDense(d): x is (B, N, d). Small, TPU-friendly width (d multiple
    # of 128 -> lane-dense); N deliberately NOT a tile multiple to exercise the
    # flatten + pad + slice path.
    B, N, d = 2, 100, 128

    key = jax.random.PRNGKey(0)
    kx, kw = jax.random.split(key)
    x = jax.random.normal(kx, (B, N, d), jnp.float32)
    # torch Linear weight layout: (d_out, d_in)
    w = jax.random.normal(kw, (d, d), jnp.float32) * (1.0 / math.sqrt(d))

    ref = jnp.einsum("bni,oi->bno", x, w)   # y = x @ W^T

    # f32 end-to-end path
    w_t = prepare_weight(w)                 # one-time, outside the forward
    fwd = jax.jit(multi_head_dense)
    out = jax.block_until_ready(fwd(x, w_t))
    assert out.shape == (B, N, d), out.shape
    assert out.dtype == jnp.float32
    assert jnp.all(jnp.isfinite(out))
    assert jnp.allclose(out, ref, atol=1e-3, rtol=1e-3)

    # bf16 storage path (all generations): bf16 activations from the producer +
    # one-time bf16 weight -> bf16 stores; f32 accumulation inside the kernel.
    w_bf16 = prepare_weight(w, dtype=jnp.bfloat16)
    x_bf16 = x.astype(jnp.bfloat16)         # producer-side dtype choice
    out_bf16 = jax.block_until_ready(jax.jit(multi_head_dense)(x_bf16, w_bf16))
    assert out_bf16.shape == (B, N, d)
    assert out_bf16.dtype == jnp.bfloat16
    assert jnp.allclose(out_bf16.astype(jnp.float32), ref, atol=1e-1, rtol=5e-2)

    print("KERNEL_OK")
</pallas_src>

<mosaic_0001>
module attributes {stable_mosaic.version = 11 : i64} {
  func.func @_dense_kernel(%arg0: i32, %arg1: memref<96x128xf32, #tpu.memory_space<vmem>>, %arg2: memref<128x128xf32, #tpu.memory_space<vmem>>, %arg3: memref<96x128xf32, #tpu.memory_space<vmem>>) attributes {dimension_semantics = [#tpu.dimension_semantics<parallel>], iteration_bounds = array<i64: 3>, scalar_prefetch = 0 : i64, scratch_operands = 0 : i64, tpu.core_type = #tpu.core_type<tc>, window_params = [{transform_indices = @transform_0, window_bounds = array<i64: 96, 128>}, {pipeline_mode = #tpu.pipeline_mode<synchronous>, transform_indices = @transform_1, window_bounds = array<i64: 128, 128>}, {transform_indices = @transform_2, window_bounds = array<i64: 96, 128>}]} {
    %c0 = arith.constant 0 : index
    %c0_0 = arith.constant 0 : index
    %0 = vector.load %arg1[%c0, %c0_0] : memref<96x128xf32, #tpu.memory_space<vmem>>, vector<96x128xf32>
    %c0_1 = arith.constant 0 : index
    %c0_2 = arith.constant 0 : index
    %1 = vector.load %arg2[%c0_1, %c0_2] : memref<128x128xf32, #tpu.memory_space<vmem>>, vector<128x128xf32>
    %cst = arith.constant dense<0.000000e+00> : vector<96x128xf32>
    %2 = tpu.matmul %0, %1, %cst {dimension_numbers = #tpu.dot_dimension_numbers<[1], [0], [0], [1], [0, 0, 1, 1], [], []>} : vector<96x128xf32>, vector<128x128xf32>, vector<96x128xf32> -> vector<96x128xf32>
    %c0_3 = arith.constant 0 : index
    %c0_4 = arith.constant 0 : index
    %3 = vector.load %arg3[%c0_3, %c0_4] : memref<96x128xf32, #tpu.memory_space<vmem>>, vector<96x128xf32>
    tpu.vector_store %arg3[%c0_3, %c0_4], %2 {strides = array<i32>} : memref<96x128xf32, #tpu.memory_space<vmem>>, vector<96x128xf32>,
    return
  }
  func.func @transform_0(%arg0: i32) -> (i32, i32) {
    %c0_i32 = arith.constant 0 : i32
    %c0_i32_0 = arith.constant 0 : i32
    return %arg0, %c0_i32 : i32, i32
  }
  func.func @transform_1(%arg0: i32) -> (i32, i32) {
    %c0_i32 = arith.constant 0 : i32
    %c0_i32_0 = arith.constant 0 : i32
    %c0_i32_1 = arith.constant 0 : i32
    return %c0_i32, %c0_i32_0 : i32, i32
  }
  func.func @transform_2(%arg0: i32) -> (i32, i32) {
    %c0_i32 = arith.constant 0 : i32
    %c0_i32_0 = arith.constant 0 : i32
    return %arg0, %c0_i32 : i32, i32
  }
}

</mosaic_0001>

<llo_original>
// kernel: multi_head_dense.1
$region0: #{multi_head_dense.1}
  #allocation0 [shape = 'u32[]', space=smem, size = 0x4, offset = 0x4, fixed_abs, tag = 'smem constant byte address 0x4 - core index']
  #allocation1 [shape = 'u32[72,128]{1,0:T(1,128)}', space=vmem, size = 0x9000, scoped, tag = 'internal scratch']
  %s0 = inlined_call_operand.vmem [shape: f32[288,128], index: 0, kind: input, shape index: {}]
  %s1 = inlined_call_operand.vmem [shape: f32[128,128], index: 1, kind: input, shape index: {}]
  %s2 = inlined_call_operand.vmem [shape: f32[288,128], index: 2, kind: output, shape index: {}]
  %s3 = sld [smem:[#allocation0]]
  $region41: #{multi_head_dense.1} parent=0
    _
  %s5 = ssub.s32 1, %s3
  %s6 = scalar_select 0, %s5, %s3
  loop: start=0, step=1, limit=5
  $region2: #{multi_head_dense.1} parent=0 // loop_pre_header
    _
  $region3: #{multi_head_dense.1} parent=0 // loop_header
    %s8 = sphi 0, %s12
    %p9 = scmp.ge.s32.totalorder %s8, 5
    %s18 = sphi 0, %s20
    %s21 = sphi 0, %s18
    %s22 = sphi 0, %s21
    %s38 = sphi 0, %s22
    %s42 = sphi 0, %s42
    %s44 = sphi 0, %s42
    %s45 = sphi 0, %s44
    %s59 = sphi 0, %s45
    %s65 = sphi 0, %s67
    %s68 = sphi 0, %s65
    %s69 = sphi 0, %s68
    %s85 = sphi 0, %s69
  $region4: #{multi_head_dense.1} parent=0 // loop_header_branch
    %11 = sbr.rel (%p9) target = $region8
  $region5: #{multi_head_dense.1} parent=0 // loop_body
    %s13 = ssub.s32 %s8, 1
    %s14 = ssub.s32 %s8, 2
    %s15 = sadd.s32 %s8, 1
    %s16 = ssub.s32 %s8, %s15
    %p17 = scmp.eq.s32.totalorder %s16, 0
    %s19 = sadd.s32 %s18, 1
    %s20 = scalar_select %p17, %s18, %s19
    %p23 = pneg %p17
    %p24 = scmp.eq.s32.totalorder %s8, 2
    %p25 = por %p23, %p24
    %p26 = scmp.ne.s32.totalorder %s18, %s21
    %p27 = scmp.eq.s32.totalorder %s8, 0
    %p28 = por %p26, %p27
    %p29 = scmp.ne.s32.totalorder %s18, %s21
    %p30 = scmp.eq.s32.totalorder %s13, 2
    %p31 = por %p29, %p30
    %p32 = scmp.ne.s32.totalorder %s21, %s22
    %p33 = scmp.eq.s32.totalorder %s13, 0
    %p34 = por %p32, %p33
    %p35 = scmp.ne.s32.totalorder %s21, %s22
    %p36 = scmp.eq.s32.totalorder %s14, 2
    %p37 = por %p35, %p36
    %p39 = scmp.ne.s32.totalorder %s22, %s38
    %p40 = scmp.eq.s32.totalorder %s14, 0
    %p41 = por %p39, %p40
    %s43 = sadd.s32 %s42, 1
    %p46 = scmp.eq.s32.totalorder %s8, 2
    %p47 = scmp.ne.s32.totalorder %s42, %s44
    %p48 = scmp.eq.s32.totalorder %s8, 0
    %p49 = por %p47, %p48
    %p50 = scmp.ne.s32.totalorder %s42, %s44
    %p51 = scmp.eq.s32.totalorder %s13, 2
    %p52 = por %p50, %p51
    %p53 = scmp.ne.s32.totalorder %s44, %s45
    %p54 = scmp.eq.s32.totalorder %s13, 0
    %p55 = por %p53, %p54
    %p56 = scmp.ne.s32.totalorder %s44, %s45
    %p57 = scmp.eq.s32.totalorder %s14, 2
    %p58 = por %p56, %p57
    %p60 = scmp.ne.s32.totalorder %s45, %s59
    %p61 = scmp.eq.s32.totalorder %s14, 0
    %p62 = por %p60, %p61
    %s63 = ssub.s32 %s8, %s15
    %p64 = scmp.eq.s32.totalorder %s63, 0
    %s66 = sadd.s32 %s65, 1
    %s67 = scalar_select %p64, %s65, %s66
    %p70 = pneg %p64
    %p71 = scmp.eq.s32.totalorder %s8, 2
    %p72 = por %p70, %p71
    %p73 = scmp.ne.s32.totalorder %s65, %s68
    %p74 = scmp.eq.s32.totalorder %s8, 0
    %p75 = por %p73, %p74
    %p76 = scmp.ne.s32.totalorder %s65, %s68
    %p77 = scmp.eq.s32.totalorder %s13, 2
    %p78 = por %p76, %p77
    %p79 = scmp.ne.s32.totalorder %s68, %s69
    %p80 = scmp.eq.s32.totalorder %s13, 0
    %p81 = por %p79, %p80
    %p82 = scmp.ne.s32.totalorder %s68, %s69
    %p83 = scmp.eq.s32.totalorder %s14, 2
    %p84 = por %p82, %p83
    %p86 = scmp.ne.s32.totalorder %s69, %s85
    %p87 = scmp.eq.s32.totalorder %s14, 0
    %p88 = por %p86, %p87
    %p89 = scmp.le.s32.totalorder 1, %s8
    %p90 = scmp.lt.s32.totalorder %s8, 4
    %p91 = pnand %p89, %p90
    %p92 = pneg %p91
    // Predicated region
    $region9: #{multi_head_dense.1} parent=5 // pred_check
      _
    $region10: #{multi_head_dense.1} parent=5 // pred_check_branch
      %94 = sbr.rel (%p91) target = $region12
    $region11: #{multi_head_dense.1} parent=5 // pred_region
      %s95 = ssub.s32 %s8, 1
      // Predicated region
      $region13: #{multi_head_dense.1} parent=11 // pred_check
        %p96 = pneg %p55
      $region14: #{multi_head_dense.1} parent=11 // pred_check_branch
        %98 = sbr.rel (%p96) target = $region16
      $region15: #{multi_head_dense.1} parent=11 // pred_region
        _
      $region16: #{multi_head_dense.1} parent=11 // pred_fallthru
        _
    $region12: #{multi_head_dense.1} parent=5 // pred_fallthru
      _
    %p99 = scmp.lt.s32.totalorder %s8, 3
    // Predicated region
    $region17: #{multi_head_dense.1} parent=5 // pred_check
      %p100 = pneg %p99
    $region18: #{multi_head_dense.1} parent=5 // pred_check_branch
      %102 = sbr.rel (%p100) target = $region20
    $region19: #{multi_head_dense.1} parent=5 // pred_region
      // Predicated region
      $region21: #{multi_head_dense.1} parent=19 // pred_check
        %p103 = pneg %p28
      $region22: #{multi_head_dense.1} parent=19 // pred_check_branch
        %105 = sbr.rel (%p103) target = $region24
      $region23: #{multi_head_dense.1} parent=19 // pred_region
        %s106 = smul.u32 12, %s8
        %p107 = scmp.lt.s32.totalorder %s106, 35
        %s108 = scalar_select %p107, %s106, 35
        %s109 = smul.addr %s108, 8
        %s110 = scalar_lea.vmem %s0, %s109
        %s111 = smul.u32 12, %s8
      $region24: #{multi_head_dense.1} parent=19 // pred_fallthru
        _
    $region20: #{multi_head_dense.1} parent=5 // pred_fallthru
      _
    %p112 = scmp.le.s32.totalorder 1, %s8
    %p113 = scmp.lt.s32.totalorder %s8, 4
    %p114 = pnand %p112, %p113
    %p115 = pneg %p114
    // Predicated region
    $region25: #{multi_head_dense.1} parent=5 // pred_check
      _
    $region26: #{multi_head_dense.1} parent=5 // pred_check_branch
      %117 = sbr.rel (%p114) target = $region28
    $region27: #{multi_head_dense.1} parent=5 // pred_region
      %s118 = ssub.s32 %s8, 1
      %s119 = smul.u32 12, %s13
      %p120 = scmp.lt.s32.totalorder %s119, 35
      %s121 = scalar_select %p120, %s119, 35
      %s122 = smul.addr %s121, 8
      %s123 = scalar_lea.vmem %s0, %s122
      %p124 = pneg %p34
      %p125 = pneg %p31
      %p126 = pneg %p55
      %p127 = pneg %p52
      %p128 = pneg %p81
      %p129 = pneg %p78
      %s130 = smul.u32 12, %s13
      %p131 = scmp.lt.s32.totalorder %s130, 35
      %s132 = scalar_select %p131, %s130, 35
      %s133 = smul.addr %s132, 8
      %s134 = scalar_lea.vmem %s2, %s133
      %s135 = smul.u32 12, %s13
      %p136 = scmp.lt.s32.totalorder %s135, 35
      %s137 = scalar_select %p136, %s135, 35
      %s138 = smul.addr %s137, 8
      %s139 = scalar_lea.vmem %s0, %s138
      %s140 = smul.u32 12, %s13
      %s141 = smul.u32 12, %s13
      %p142 = scmp.lt.s32.totalorder %s141, 35
      %s143 = scalar_select %p142, %s141, 35
      %s144 = smul.addr %s143, 8
      %s145 = scalar_lea.vmem %s2, %s144
      %s146 = smul.u32 12, %s13
      %v147 = vld [vmem:[%s139] sm:$0xff]
      %v148 = vld [vmem:[%s139 + $0x8] sm:$0xff]
      %v149 = vld [vmem:[%s139 + $0x10] sm:$0xff]
      %v150 = vld [vmem:[%s139 + $0x18] sm:$0xff]
      %v151 = vld [vmem:[%s139 + $0x20] sm:$0xff]
      %v152 = vld [vmem:[%s139 + $0x28] sm:$0xff]
      %v153 = vld [vmem:[%s139 + $0x30] sm:$0xff]
      %v154 = vld [vmem:[%s139 + $0x38] sm:$0xff]
      %v155 = vld [vmem:[%s139 + $0x40] sm:$0xff]
      %v156 = vld [vmem:[%s139 + $0x48] sm:$0xff]
      %v157 = vld [vmem:[%s139 + $0x50] sm:$0xff]
      %v158 = vld [vmem:[%s139 + $0x58] sm:$0xff]
      %v159 = vld [vmem:[%s1] sm:$0xff]
      %v160 = vld [vmem:[%s1 + $0x8] sm:$0xff]
      %v161 = vld [vmem:[%s1 + $0x10] sm:$0xff]
      %v162 = vld [vmem:[%s1 + $0x18] sm:$0xff]
      %v163 = vld [vmem:[%s1 + $0x20] sm:$0xff]
      %v164 = vld [vmem:[%s1 + $0x28] sm:$0xff]
      %v165 = vld [vmem:[%s1 + $0x30] sm:$0xff]
      %v166 = vld [vmem:[%s1 + $0x38] sm:$0xff]
      %v167 = vld [vmem:[%s1 + $0x40] sm:$0xff]
      %v168 = vld [vmem:[%s1 + $0x48] sm:$0xff]
      %v169 = vld [vmem:[%s1 + $0x50] sm:$0xff]
      %v170 = vld [vmem:[%s1 + $0x58] sm:$0xff]
      %v171 = vld [vmem:[%s1 + $0x60] sm:$0xff]
      %v172 = vld [vmem:[%s1 + $0x68] sm:$0xff]
      %v173 = vld [vmem:[%s1 + $0x70] sm:$0xff]
      %v174 = vld [vmem:[%s1 + $0x78] sm:$0xff]
      %175 = vmatpush.msra.mxu0 %v174
      %176 = vmatpush.msra.mxu0 %v173
      %177 = vmatpush.msra.mxu0 %v172
      %178 = vmatpush.msra.mxu0 %v171
      %179 = vmatpush.msra.mxu0 %v170
      %180 = vmatpush.msra.mxu0 %v169
      %181 = vmatpush.msra.mxu0 %v168
      %182 = vmatpush.msra.mxu0 %v167
      %183 = vmatpush.msra.mxu0 %v166
      %184 = vmatpush.msra.mxu0 %v165
      %185 = vmatpush.msra.mxu0 %v164
      %186 = vmatpush.msra.mxu0 %v163
      %187 = vmatpush.msra.mxu0 %v162
      %188 = vmatpush.msra.mxu0 %v161
      %189 = vmatpush.msra.mxu0 %v160
      %190 = vmatpush.msra.mxu0 %v159
      %191 = vmatmul.f32.gmra.mxu0 %v147
      %v192 = vpop.f32.mrf.mxu0
      %v193 = vadd.f32 0.0, %v192
      %194 = vmatmul.f32.gmra.mxu0 %v148
      %v195 = vpop.f32.mrf.mxu0
      %v196 = vadd.f32 0.0, %v195
      %197 = vmatmul.f32.gmra.mxu0 %v149
      %v198 = vpop.f32.mrf.mxu0
      %v199 = vadd.f32 0.0, %v198
      %200 = vmatmul.f32.gmra.mxu0 %v150
      %v201 = vpop.f32.mrf.mxu0
      %v202 = vadd.f32 0.0, %v201
      %203 = vmatmul.f32.gmra.mxu0 %v151
      %v204 = vpop.f32.mrf.mxu0
      %v205 = vadd.f32 0.0, %v204
      %206 = vmatmul.f32.gmra.mxu0 %v152
      %v207 = vpop.f32.mrf.mxu0
      %v208 = vadd.f32 0.0, %v207
      %209 = vmatmul.f32.gmra.mxu0 %v153
      %v210 = vpop.f32.mrf.mxu0
      %v211 = vadd.f32 0.0, %v210
      %212 = vmatmul.f32.gmra.mxu0 %v154
      %v213 = vpop.f32.mrf.mxu0
      %v214 = vadd.f32 0.0, %v213
      %215 = vmatmul.f32.gmra.mxu0 %v155
      %v216 = vpop.f32.mrf.mxu0
      %v217 = vadd.f32 0.0, %v216
      %218 = vmatmul.f32.gmra.mxu0 %v156
      %v219 = vpop.f32.mrf.mxu0
      %v220 = vadd.f32 0.0, %v219
      %221 = vmatmul.f32.gmra.mxu0 %v157
      %v222 = vpop.f32.mrf.mxu0
      %v223 = vadd.f32 0.0, %v222
      %224 = vmatmul.f32.gmra.mxu0 %v158
      %v225 = vpop.f32.mrf.mxu0
      %v226 = vadd.f32 0.0, %v225
      %227 = vdwg.mxu0
      %228 = vst [vmem:[%s145] sm:$0xff] %v193
      %229 = vst [vmem:[%s145 + $0x8] sm:$0xff] %v196
      %230 = vst [vmem:[%s145 + $0x10] sm:$0xff] %v199
      %231 = vst [vmem:[%s145 + $0x18] sm:$0xff] %v202
      %232 = vst [vmem:[%s145 + $0x20] sm:$0xff] %v205
      %233 = vst [vmem:[%s145 + $0x28] sm:$0xff] %v208
      %234 = vst [vmem:[%s145 + $0x30] sm:$0xff] %v211
      %235 = vst [vmem:[%s145 + $0x38] sm:$0xff] %v214
      %236 = vst [vmem:[%s145 + $0x40] sm:$0xff] %v217
      %237 = vst [vmem:[%s145 + $0x48] sm:$0xff] %v220
      %238 = vst [vmem:[%s145 + $0x50] sm:$0xff] %v223
      %239 = vst [vmem:[%s145 + $0x58] sm:$0xff] %v226
      %s240 = smul.u32 12, %s13
      %p241 = scmp.lt.s32.totalorder %s240, 35
      %s242 = scalar_select %p241, %s240, 35
      %s243 = smul.addr %s242, 8
      %s244 = scalar_lea.vmem %s2, %s243
      // Predicated region
      $region29: #{multi_head_dense.1} parent=27 // pred_check
        %p245 = pneg %p78
      $region30: #{multi_head_dense.1} parent=27 // pred_check_branch
        %247 = sbr.rel (%p245) target = $region32
      $region31: #{multi_head_dense.1} parent=27 // pred_region
        %s248 = smul.u32 12, %s13
      $region32: #{multi_head_dense.1} parent=27 // pred_fallthru
        _
    $region28: #{multi_head_dense.1} parent=5 // pred_fallthru
      _
    %p249 = scmp.le.s32.totalorder 2, %s8
    // Predicated region
    $region33: #{multi_head_dense.1} parent=5 // pred_check
      %p250 = pneg %p249
    $region34: #{multi_head_dense.1} parent=5 // pred_check_branch
      %252 = sbr.rel (%p250) target = $region36
    $region35: #{multi_head_dense.1} parent=5 // pred_region
      %s253 = ssub.s32 %s8, 2
      // Predicated region
      $region37: #{multi_head_dense.1} parent=35 // pred_check
        %p254 = pneg %p84
      $region38: #{multi_head_dense.1} parent=35 // pred_check_branch
        %256 = sbr.rel (%p254) target = $region40
      $region39: #{multi_head_dense.1} parent=35 // pred_region
        %s257 = smul.u32 12, %s14
        %p258 = scmp.lt.s32.totalorder %s257, 35
        %s259 = scalar_select %p258, %s257, 35
        %s260 = smul.addr %s259, 8
        %s261 = scalar_lea.vmem %s2, %s260
      $region40: #{multi_head_dense.1} parent=35 // pred_fallthru
        _
    $region36: #{multi_head_dense.1} parent=5 // pred_fallthru
      _
  $region6: #{multi_head_dense.1} parent=0 // loop_footer
    %s12 = sadd.s32 1, %s8
  $region7: #{multi_head_dense.1} parent=0 // loop_footer_branch
    %7 = sbr.rel target = $region3
  $region8: #{multi_head_dense.1} parent=0 // loop_exit
    _

</llo_original>
